<compile_context>
chip_gen: v6e
topology: v6e:2x2x1
jax: 0.10.0
libtpu: 0.0.40
codegen_flags: <defaults>
</compile_context>

<pallas_src>
import functools

import numpy as np
import jax
import jax.numpy as jnp
from jax import lax
from jax.experimental import pallas as pl
from jax.experimental.pallas import tpu as pltpu


def _round_up(x, m):
    return ((x + m - 1) // m) * m


# ---------------------------------------------------------------------------
# Generation-aware tuning knobs
# ---------------------------------------------------------------------------
def _vmem_budget_bytes():
    """VMEM working-set budget; also passed as the explicit compiler limit."""
    physical = None
    try:
        physical = int(pltpu.get_tpu_info().vmem_capacity_bytes)
    except Exception:
        physical = None
    if not physical or physical <= 0:
        physical = 64 * 1024 * 1024          # conservative: v7x per-TC VMEM
    # v5e/v6e (128 MiB physical) -> 48 MiB; v7x (64 MiB physical) -> ~42 MiB.
    return int(min(48 * 1024 * 1024, (physical * 2) // 3))


def _num_tensorcores():
    """Dual-TC grid split only on v7x; v5e/v6e are single-TensorCore chips."""
    try:
        kind = (jax.devices()[0].device_kind or "").lower()
    except Exception:
        kind = ""
    if "v7" in kind or "tpu7" in kind:
        return 2
    return 1


def _plan_tiling(B, D, itemsize, *, target_step_bytes=4 * 1024 * 1024):
    """Choose (tk, nc, kb, d_pad, vmem_budget) for the cross/diag kernel."""
    budget = _vmem_budget_bytes()
    sub = 16 if itemsize == 2 else 8         # sublane packing of a (B, tk) tile
    Bp = _round_up(B, sub)

    # Per-column VMEM bytes: 2 inputs x 2 pipeline buffers, plus one extra
    # copy of each loaded block as safety margin for in-kernel temporaries.
    per_col = (2 * 2 + 2) * Bp * itemsize
    fixed = 4 * 1024 * 1024                  # accumulators + chunk temps + slack
    tk_cap = max(512, ((budget - fixed) // per_col) // 512 * 512)

    # Per-step HBM byte target over both streamed arrays.
    tk_target = _round_up(max(1, target_step_bytes // (2 * B * itemsize)), 512)

    tk = max(512, min(tk_target, tk_cap, _round_up(D, 512)))

    nblk = -(-D // tk)
    nc = _num_tensorcores()
    if nblk < nc:
        nc = 1
    nblk = _round_up(nblk, nc)
    kb = nblk // nc
    d_pad = nblk * tk
    return tk, nc, kb, d_pad, budget


# ---------------------------------------------------------------------------
# Pallas kernel: cross matrix + exact diagonal + row norms, reduced over D
# ---------------------------------------------------------------------------
def _cross_diag_norm_kernel(t_ref, s_ref, m_ref, d_ref, tn_ref, sn_ref):
    k = pl.program_id(1)                     # reduction axis (innermost)

    @pl.when(k == 0)
    def _():
        m_ref[...] = jnp.zeros_like(m_ref)
        d_ref[...] = jnp.zeros_like(d_ref)
        tn_ref[...] = jnp.zeros_like(tn_ref)
        sn_ref[...] = jnp.zeros_like(sn_ref)

    t = t_ref[...]                           # (B, tk) translate block (bf16/f32)
    s = s_ref[...]                           # (B, tk) style block

    # cross[i, j] = sum_d t[i, d] * s[j, d]; contraction folded into the MXU.
    cross = lax.dot_general(
        t, s,
        dimension_numbers=(((1,), (1,)), ((), ())),
        preferred_element_type=jnp.float32)
    m_ref[0] += cross

    # Exact positive-pair diagonal sum_d (t-s)^2 and both row norms, in f32 on
    # data already resident in VMEM (saves two extra HBM passes vs XLA norms).
    # Chunked over the lane axis so the f32 upcast temporaries stay small even
    # for very large tk (avoids trading the DMA bottleneck for spills).
    B, tk = t_ref.shape
    chunk = 2048 if tk % 2048 == 0 else (1024 if tk % 1024 == 0 else 512)
    n_chunks = tk // chunk

    def body(c, carry):
        d_acc, tn_acc, sn_acc = carry
        off = pl.multiple_of(c * chunk, chunk)
        tc = t_ref[:, pl.ds(off, chunk)].astype(jnp.float32)
        sc = s_ref[:, pl.ds(off, chunk)].astype(jnp.float32)
        diff = tc - sc
        d_acc = d_acc + jnp.sum(diff * diff, axis=1, keepdims=True)
        tn_acc = tn_acc + jnp.sum(tc * tc, axis=1, keepdims=True)
        sn_acc = sn_acc + jnp.sum(sc * sc, axis=1, keepdims=True)
        return d_acc, tn_acc, sn_acc

    zero = jnp.zeros((B, 1), jnp.float32)
    d_sum, tn_sum, sn_sum = lax.fori_loop(0, n_chunks, body, (zero, zero, zero))
    d_ref[0] += d_sum
    tn_ref[0] += tn_sum
    sn_ref[0] += sn_sum


# ---------------------------------------------------------------------------
# EFDM_loss forward (sorting + glue in XLA, distance reduction in the kernel)
# ---------------------------------------------------------------------------
@functools.partial(jax.jit, static_argnames=("feature_dtype",))
def _efdm_loss_jit(style_E, style_S, translate_E, translate_S, neg_mask, *,
                   feature_dtype=jnp.bfloat16):
    s_parts, t_parts = [], []

    def add_pair(style_t, trans_t):
        B, C, H, W = style_t.shape
        n = H * W
        scale = 1.0 / float(np.sqrt(C * n))
        # TODO(synk): sort/argsort has no clean Pallas/Mosaic lowering on TPU;
        # it stays in XLA, only the distance reduction runs in the kernel.
        s_sorted = jnp.sort(style_t.reshape(B, C, n).astype(jnp.float32), axis=-1)
        t_sorted = jnp.sort(trans_t.reshape(B, C, n).astype(jnp.float32), axis=-1)
        s_parts.append((s_sorted * scale).reshape(B, C * n).astype(feature_dtype))
        t_parts.append((t_sorted * scale).reshape(B, C * n).astype(feature_dtype))

    for i in range(len(style_E)):
        add_pair(style_E[i][0], translate_E[i][0])
        add_pair(style_E[i][1], translate_E[i][1])
    for i in range(len(style_S)):
        add_pair(style_S[i][0], translate_S[i][0])
        add_pair(style_S[i][1], translate_S[i][1])

    B = s_parts[0].shape[0]
    D = sum(p.shape[1] for p in s_parts)
    itemsize = np.dtype(feature_dtype).itemsize
    tk, nc, kb, d_pad, vmem_budget = _plan_tiling(B, D, itemsize)

    # Fold padding-to-a-multiple-of-tk into the single concat write (avoids a
    # separate jnp.pad pass that would re-read/re-write both (B, D) arrays).
    if d_pad != D:
        pad = jnp.zeros((B, d_pad - D), feature_dtype)
        s_parts.append(pad)
        t_parts.append(pad)
    s_all = jnp.concatenate(s_parts, axis=-1)    # (B, d_pad)
    t_all = jnp.concatenate(t_parts, axis=-1)    # (B, d_pad)

    def in_index_map(c, k):
        return (0, c * kb + k)

    def out_index_map(c, k):
        return (c, 0, 0)

    cross, diag, t_norm, s_norm = pl.pallas_call(
        _cross_diag_norm_kernel,
        out_shape=(jax.ShapeDtypeStruct((nc, B, B), jnp.float32),
                   jax.ShapeDtypeStruct((nc, B, 1), jnp.float32),
                   jax.ShapeDtypeStruct((nc, B, 1), jnp.float32),
                   jax.ShapeDtypeStruct((nc, B, 1), jnp.float32)),
        grid_spec=pltpu.PrefetchScalarGridSpec(
            num_scalar_prefetch=0,
            grid=(nc, kb),
            in_specs=[
                pl.BlockSpec((B, tk), in_index_map),
                pl.BlockSpec((B, tk), in_index_map),
            ],
            out_specs=[
                pl.BlockSpec((1, B, B), out_index_map),
                pl.BlockSpec((1, B, 1), out_index_map),
                pl.BlockSpec((1, B, 1), out_index_map),
                pl.BlockSpec((1, B, 1), out_index_map),
            ],
        ),
        compiler_params=pltpu.CompilerParams(
            dimension_semantics=("parallel", "arbitrary"),
            vmem_limit_bytes=int(vmem_budget)),
    )(t_all, s_all)

    cross = jnp.sum(cross, axis=0)               # (B, B)
    diag = jnp.sum(diag, axis=0)[:, 0]           # (B,)
    t_norm = jnp.sum(t_norm, axis=0)[:, 0]       # (B,)
    s_norm = jnp.sum(s_norm, axis=0)[:, 0]       # (B,)

    M = t_norm[:, None] + s_norm[None, :] - 2.0 * cross
    # Replace the (cancellation-prone) diagonal with the exact in-kernel sum.
    eye = jnp.eye(B, dtype=bool)
    M = jnp.where(eye, diag[:, None], M)

    poss = jnp.diagonal(M)                        # (B,)
    neg = jnp.sum(M * neg_mask, axis=1)           # (B,)
    # NOTE: divides by zero if a row of neg_mask is empty (matches reference).
    return jnp.sum(poss / neg)


def efdm_loss(style_E, style_S, translate_E, translate_S, neg_idx, *,
              feature_dtype=jnp.bfloat16):
    batch = style_E[0][0].shape[0]
    neg_mask = np.zeros((batch, batch), np.float32)
    for b in range(batch):
        for nb in neg_idx[b]:
            neg_mask[b, nb] = 1.0
    return _efdm_loss_jit(tuple(tuple(p) for p in style_E),
                          tuple(tuple(p) for p in style_S),
                          tuple(tuple(p) for p in translate_E),
                          tuple(tuple(p) for p in translate_S),
                          jnp.asarray(neg_mask),
                          feature_dtype=feature_dtype)


# ---------------------------------------------------------------------------
# Faithful (torch-like) pure-JAX reference, for verification
# ---------------------------------------------------------------------------
def _efdm_single_ref(style, trans):
    B, C, H, W = style.shape
    s = style.reshape(B, C, -1).astype(jnp.float32)
    t = trans.reshape(B, C, -1).astype(jnp.float32)
    value_style = jnp.sort(s, axis=-1)
    index_trans = jnp.argsort(t, axis=-1)
    inverse_index = jnp.argsort(index_trans, axis=-1)
    target = jnp.take_along_axis(value_style, inverse_index, axis=-1)
    return jnp.mean((t - target) ** 2)


def efdm_loss_ref(style_E, style_S, translate_E, translate_S, neg_idx):
    batch = style_E[0][0].shape[0]
    loss = 0.0
    for b in range(batch):
        poss = 0.0
        neg = 0.0
        for i in range(len(style_E)):
            for f in range(2):
                poss += _efdm_single_ref(style_E[i][f][b:b + 1],
                                         translate_E[i][f][b:b + 1])
        for i in range(len(style_S)):
            for f in range(2):
                poss += _efdm_single_ref(style_S[i][f][b:b + 1],
                                         translate_S[i][f][b:b + 1])
        for nb in neg_idx[b]:
            for i in range(len(style_E)):
                for f in range(2):
                    neg += _efdm_single_ref(style_E[i][f][nb:nb + 1],
                                            translate_E[i][f][b:b + 1])
            for i in range(len(style_S)):
                for f in range(2):
                    neg += _efdm_single_ref(style_S[i][f][nb:nb + 1],
                                            translate_S[i][f][b:b + 1])
        loss += poss / neg
    return loss


# ---------------------------------------------------------------------------
if __name__ == "__main__":
    key = jax.random.PRNGKey(0)
    batch = 2

    # Small multi-scale feature pyramids: style_E / translate_E have 2 levels,
    # style_S / translate_S have 1 level; each level is a pair of NCHW tensors.
    shapes_E = [(batch, 4, 16, 16), (batch, 8, 8, 8)]
    shapes_S = [(batch, 4, 8, 8)]

    def make_pairs(key, shapes):
        out = []
        for shp in shapes:
            key, k0, k1 = jax.random.split(key, 3)
            out.append((jax.random.normal(k0, shp, jnp.float32),
                        jax.random.normal(k1, shp, jnp.float32)))
        return key, out

    key, style_E = make_pairs(key, shapes_E)
    key, translate_E = make_pairs(key, shapes_E)
    key, style_S = make_pairs(key, shapes_S)
    key, translate_S = make_pairs(key, shapes_S)

    # negatives: every other batch element
    neg_idx = [[nb for nb in range(batch) if nb != b] for b in range(batch)]

    # Default fast path: bf16 feature streaming, f32 accumulation.
    loss_bf16 = jax.block_until_ready(
        efdm_loss(style_E, style_S, translate_E, translate_S, neg_idx))
    # f32 streaming path for a tight check against the reference.
    loss_f32 = jax.block_until_ready(
        efdm_loss(style_E, style_S, translate_E, translate_S, neg_idx,
                  feature_dtype=jnp.float32))
    loss_ref = jax.block_until_ready(
        efdm_loss_ref(style_E, style_S, translate_E, translate_S, neg_idx))

    assert jnp.allclose(loss_f32, loss_ref, rtol=5e-3, atol=1e-5), (
        "f32 path mismatch", loss_f32, loss_ref)
    assert jnp.allclose(loss_bf16, loss_ref, rtol=5e-2, atol=1e-3), (
        "bf16 path mismatch", loss_bf16, loss_ref)
    print("KERNEL_OK")
</pallas_src>

<mosaic_0001>
module attributes {stable_mosaic.version = 11 : i64} {
  func.func @_cross_diag_norm_kernel(%arg0: i32, %arg1: i32, %arg2: memref<2x3584xbf16, #tpu.memory_space<vmem>>, %arg3: memref<2x3584xbf16, #tpu.memory_space<vmem>>, %arg4: memref<1x2x2xf32, #tpu.memory_space<vmem>>, %arg5: memref<1x2x1xf32, #tpu.memory_space<vmem>>, %arg6: memref<1x2x1xf32, #tpu.memory_space<vmem>>, %arg7: memref<1x2x1xf32, #tpu.memory_space<vmem>>) attributes {dimension_semantics = [#tpu.dimension_semantics<parallel>, #tpu.dimension_semantics<arbitrary>], iteration_bounds = array<i64: 1, 1>, scalar_prefetch = 0 : i64, scratch_operands = 0 : i64, tpu.core_type = #tpu.core_type<tc>, window_params = [{transform_indices = @transform_0, window_bounds = array<i64: 2, 3584>}, {transform_indices = @transform_1, window_bounds = array<i64: 2, 3584>}, {transform_indices = @transform_2, window_bounds = array<i64: 1, 2, 2>}, {transform_indices = @transform_3, window_bounds = array<i64: 1, 2, 1>}, {transform_indices = @transform_4, window_bounds = array<i64: 1, 2, 1>}, {transform_indices = @transform_5, window_bounds = array<i64: 1, 2, 1>}]} {
    %c0_i32 = arith.constant 0 : i32
    %0 = arith.cmpi eq, %arg1, %c0_i32 : i32
    %1 = arith.extui %0 : i1 to i32
    %c0_i32_0 = arith.constant 0 : i32
    %2 = arith.cmpi ne, %1, %c0_i32_0 : i32
    scf.if %2 {
      %cst_31 = arith.constant 0.000000e+00 : f32
      %33 = vector.broadcast %cst_31 : f32 to vector<1x2x2xf32>
      %c0_32 = arith.constant 0 : index
      %c0_33 = arith.constant 0 : index
      %c0_34 = arith.constant 0 : index
      %34 = vector.load %arg4[%c0_32, %c0_33, %c0_34] : memref<1x2x2xf32, #tpu.memory_space<vmem>>, vector<1x2x2xf32>
      tpu.vector_store %arg4[%c0_32, %c0_33, %c0_34], %33 {strides = array<i32>} : memref<1x2x2xf32, #tpu.memory_space<vmem>>, vector<1x2x2xf32>,
      %cst_35 = arith.constant 0.000000e+00 : f32
      %35 = vector.broadcast %cst_35 : f32 to vector<1x2x1xf32>
      %c0_36 = arith.constant 0 : index
      %c0_37 = arith.constant 0 : index
      %c0_38 = arith.constant 0 : index
      %36 = vector.load %arg5[%c0_36, %c0_37, %c0_38] : memref<1x2x1xf32, #tpu.memory_space<vmem>>, vector<1x2x1xf32>
      tpu.vector_store %arg5[%c0_36, %c0_37, %c0_38], %35 {strides = array<i32>} : memref<1x2x1xf32, #tpu.memory_space<vmem>>, vector<1x2x1xf32>,
      %cst_39 = arith.constant 0.000000e+00 : f32
      %37 = vector.broadcast %cst_39 : f32 to vector<1x2x1xf32>
      %c0_40 = arith.constant 0 : index
      %c0_41 = arith.constant 0 : index
      %c0_42 = arith.constant 0 : index
      %38 = vector.load %arg6[%c0_40, %c0_41, %c0_42] : memref<1x2x1xf32, #tpu.memory_space<vmem>>, vector<1x2x1xf32>
      tpu.vector_store %arg6[%c0_40, %c0_41, %c0_42], %37 {strides = array<i32>} : memref<1x2x1xf32, #tpu.memory_space<vmem>>, vector<1x2x1xf32>,
      %cst_43 = arith.constant 0.000000e+00 : f32
      %39 = vector.broadcast %cst_43 : f32 to vector<1x2x1xf32>
      %c0_44 = arith.constant 0 : index
      %c0_45 = arith.constant 0 : index
      %c0_46 = arith.constant 0 : index
      %40 = vector.load %arg7[%c0_44, %c0_45, %c0_46] : memref<1x2x1xf32, #tpu.memory_space<vmem>>, vector<1x2x1xf32>
      tpu.vector_store %arg7[%c0_44, %c0_45, %c0_46], %39 {strides = array<i32>} : memref<1x2x1xf32, #tpu.memory_space<vmem>>, vector<1x2x1xf32>,
    } else {
    }
    %c0 = arith.constant 0 : index
    %c0_1 = arith.constant 0 : index
    %3 = vector.load %arg2[%c0, %c0_1] : memref<2x3584xbf16, #tpu.memory_space<vmem>>, vector<2x3584xbf16>
    %c0_2 = arith.constant 0 : index
    %c0_3 = arith.constant 0 : index
    %4 = vector.load %arg3[%c0_2, %c0_3] : memref<2x3584xbf16, #tpu.memory_space<vmem>>, vector<2x3584xbf16>
    %cst = arith.constant dense<0.000000e+00> : vector<2x2xf32>
    %5 = tpu.matmul %3, %4, %cst {dimension_numbers = #tpu.dot_dimension_numbers<[1], [1], [0], [0], [0, 0, 1, 0], [], []>} : vector<2x3584xbf16>, vector<2x3584xbf16>, vector<2x2xf32> -> vector<2x2xf32>
    %c0_4 = arith.constant 0 : index
    %c0_5 = arith.constant 0 : index
    %c0_6 = arith.constant 0 : index
    %6 = vector.load %arg4[%c0_4, %c0_5, %c0_6] : memref<1x2x2xf32, #tpu.memory_space<vmem>>, vector<1x2x2xf32>
    %7 = vector.shape_cast %6 : vector<1x2x2xf32> to vector<2x2xf32>
    %8 = arith.addf %7, %5 : vector<2x2xf32>
    %c0_7 = arith.constant 0 : index
    %c0_8 = arith.constant 0 : index
    %c0_9 = arith.constant 0 : index
    %9 = vector.load %arg4[%c0_7, %c0_8, %c0_9] : memref<1x2x2xf32, #tpu.memory_space<vmem>>, vector<1x2x2xf32>
    %10 = vector.shape_cast %9 : vector<1x2x2xf32> to vector<2x2xf32>
    %11 = vector.shape_cast %8 : vector<2x2xf32> to vector<1x2x2xf32>
    tpu.vector_store %arg4[%c0_7, %c0_8, %c0_9], %11 {strides = array<i32>} : memref<1x2x2xf32, #tpu.memory_space<vmem>>, vector<1x2x2xf32>,
    %cst_10 = arith.constant 0.000000e+00 : f32
    %12 = vector.broadcast %cst_10 : f32 to vector<2x1xf32>
    %c0_i32_11 = arith.constant 0 : i32
    %c7_i32 = arith.constant 7 : i32
    %13 = arith.addi %c0_i32_11, %c7_i32 : i32
    %c1_i32 = arith.constant 1 : i32
    %14:3 = scf.for %arg8 = %c0_i32_11 to %13 step %c1_i32 iter_args(%arg9 = %12, %arg10 = %12, %arg11 = %12) -> (vector<2x1xf32>, vector<2x1xf32>, vector<2x1xf32>)  : i32 {
      %c512_i32 = arith.constant 512 : i32
      %33 = arith.muli %arg8, %c512_i32 : i32
      %34 = tpu.assume_multiple %33, 512 : i32
      %c0_31 = arith.constant 0 : index
      %35 = arith.index_cast %34 : i32 to index
      %36 = vector.load %arg2[%c0_31, %35] : memref<2x3584xbf16, #tpu.memory_space<vmem>>, vector<2x512xbf16>
      %37 = arith.extf %36 : vector<2x512xbf16> to vector<2x512xf32>
      %c0_32 = arith.constant 0 : index
      %38 = arith.index_cast %34 : i32 to index
      %39 = vector.load %arg3[%c0_32, %38] : memref<2x3584xbf16, #tpu.memory_space<vmem>>, vector<2x512xbf16>
      %40 = arith.extf %39 : vector<2x512xbf16> to vector<2x512xf32>
      %41 = arith.subf %37, %40 : vector<2x512xf32>
      %42 = arith.mulf %41, %41 : vector<2x512xf32>
      %cst_33 = arith.constant dense<0.000000e+00> : vector<2xf32>
      %43 = vector.multi_reduction <add>, %42, %cst_33 [1] : vector<2x512xf32> to vector<2xf32>
      %44 = vector.shape_cast %43 : vector<2xf32> to vector<2x1xf32>
      %45 = arith.addf %arg9, %44 : vector<2x1xf32>
      %46 = arith.mulf %37, %37 : vector<2x512xf32>
      %cst_34 = arith.constant dense<0.000000e+00> : vector<2xf32>
      %47 = vector.multi_reduction <add>, %46, %cst_34 [1] : vector<2x512xf32> to vector<2xf32>
      %48 = vector.shape_cast %47 : vector<2xf32> to vector<2x1xf32>
      %49 = arith.addf %arg10, %48 : vector<2x1xf32>
      %50 = arith.mulf %40, %40 : vector<2x512xf32>
      %cst_35 = arith.constant dense<0.000000e+00> : vector<2xf32>
      %51 = vector.multi_reduction <add>, %50, %cst_35 [1] : vector<2x512xf32> to vector<2xf32>
      %52 = vector.shape_cast %51 : vector<2xf32> to vector<2x1xf32>
      %53 = arith.addf %arg11, %52 : vector<2x1xf32>
      scf.yield %45, %49, %53 : vector<2x1xf32>, vector<2x1xf32>, vector<2x1xf32>
    }
    %c7_i32_12 = arith.constant 7 : i32
    %c0_13 = arith.constant 0 : index
    %c0_14 = arith.constant 0 : index
    %c0_15 = arith.constant 0 : index
    %15 = vector.load %arg5[%c0_13, %c0_14, %c0_15] : memref<1x2x1xf32, #tpu.memory_space<vmem>>, vector<1x2x1xf32>
    %16 = vector.shape_cast %15 : vector<1x2x1xf32> to vector<2x1xf32>
    %17 = arith.addf %16, %14#0 : vector<2x1xf32>
    %c0_16 = arith.constant 0 : index
    %c0_17 = arith.constant 0 : index
    %c0_18 = arith.constant 0 : index
    %18 = vector.load %arg5[%c0_16, %c0_17, %c0_18] : memref<1x2x1xf32, #tpu.memory_space<vmem>>, vector<1x2x1xf32>
    %19 = vector.shape_cast %18 : vector<1x2x1xf32> to vector<2x1xf32>
    %20 = vector.shape_cast %17 : vector<2x1xf32> to vector<1x2x1xf32>
    tpu.vector_store %arg5[%c0_16, %c0_17, %c0_18], %20 {strides = array<i32>} : memref<1x2x1xf32, #tpu.memory_space<vmem>>, vector<1x2x1xf32>,
    %c0_19 = arith.constant 0 : index
    %c0_20 = arith.constant 0 : index
    %c0_21 = arith.constant 0 : index
    %21 = vector.load %arg6[%c0_19, %c0_20, %c0_21] : memref<1x2x1xf32, #tpu.memory_space<vmem>>, vector<1x2x1xf32>
    %22 = vector.shape_cast %21 : vector<1x2x1xf32> to vector<2x1xf32>
    %23 = arith.addf %22, %14#1 : vector<2x1xf32>
    %c0_22 = arith.constant 0 : index
    %c0_23 = arith.constant 0 : index
    %c0_24 = arith.constant 0 : index
    %24 = vector.load %arg6[%c0_22, %c0_23, %c0_24] : memref<1x2x1xf32, #tpu.memory_space<vmem>>, vector<1x2x1xf32>
    %25 = vector.shape_cast %24 : vector<1x2x1xf32> to vector<2x1xf32>
    %26 = vector.shape_cast %23 : vector<2x1xf32> to vector<1x2x1xf32>
    tpu.vector_store %arg6[%c0_22, %c0_23, %c0_24], %26 {strides = array<i32>} : memref<1x2x1xf32, #tpu.memory_space<vmem>>, vector<1x2x1xf32>,
    %c0_25 = arith.constant 0 : index
    %c0_26 = arith.constant 0 : index
    %c0_27 = arith.constant 0 : index
    %27 = vector.load %arg7[%c0_25, %c0_26, %c0_27] : memref<1x2x1xf32, #tpu.memory_space<vmem>>, vector<1x2x1xf32>
    %28 = vector.shape_cast %27 : vector<1x2x1xf32> to vector<2x1xf32>
    %29 = arith.addf %28, %14#2 : vector<2x1xf32>
    %c0_28 = arith.constant 0 : index
    %c0_29 = arith.constant 0 : index
    %c0_30 = arith.constant 0 : index
    %30 = vector.load %arg7[%c0_28, %c0_29, %c0_30] : memref<1x2x1xf32, #tpu.memory_space<vmem>>, vector<1x2x1xf32>
    %31 = vector.shape_cast %30 : vector<1x2x1xf32> to vector<2x1xf32>
    %32 = vector.shape_cast %29 : vector<2x1xf32> to vector<1x2x1xf32>
    tpu.vector_store %arg7[%c0_28, %c0_29, %c0_30], %32 {strides = array<i32>} : memref<1x2x1xf32, #tpu.memory_space<vmem>>, vector<1x2x1xf32>,
    return
  }
  func.func @transform_0(%arg0: i32, %arg1: i32) -> (i32, i32) {
    %c1_i32 = arith.constant 1 : i32
    %0 = arith.muli %arg0, %c1_i32 : i32
    %1 = arith.addi %0, %arg1 : i32
    %c0_i32 = arith.constant 0 : i32
    %c0_i32_0 = arith.constant 0 : i32
    return %c0_i32, %1 : i32, i32
  }
  func.func @transform_1(%arg0: i32, %arg1: i32) -> (i32, i32) {
    %c1_i32 = arith.constant 1 : i32
    %0 = arith.muli %arg0, %c1_i32 : i32
    %1 = arith.addi %0, %arg1 : i32
    %c0_i32 = arith.constant 0 : i32
    %c0_i32_0 = arith.constant 0 : i32
    return %c0_i32, %1 : i32, i32
  }
  func.func @transform_2(%arg0: i32, %arg1: i32) -> (i32, i32, i32) {
    %c0_i32 = arith.constant 0 : i32
    %c0_i32_0 = arith.constant 0 : i32
    %c0_i32_1 = arith.constant 0 : i32
    return %arg0, %c0_i32, %c0_i32_0 : i32, i32, i32
  }
  func.func @transform_3(%arg0: i32, %arg1: i32) -> (i32, i32, i32) {
    %c0_i32 = arith.constant 0 : i32
    %c0_i32_0 = arith.constant 0 : i32
    %c0_i32_1 = arith.constant 0 : i32
    return %arg0, %c0_i32, %c0_i32_0 : i32, i32, i32
  }
  func.func @transform_4(%arg0: i32, %arg1: i32) -> (i32, i32, i32) {
    %c0_i32 = arith.constant 0 : i32
    %c0_i32_0 = arith.constant 0 : i32
    %c0_i32_1 = arith.constant 0 : i32
    return %arg0, %c0_i32, %c0_i32_0 : i32, i32, i32
  }
  func.func @transform_5(%arg0: i32, %arg1: i32) -> (i32, i32, i32) {
    %c0_i32 = arith.constant 0 : i32
    %c0_i32_0 = arith.constant 0 : i32
    %c0_i32_1 = arith.constant 0 : i32
    return %arg0, %c0_i32, %c0_i32_0 : i32, i32, i32
  }
}

</mosaic_0001>

<llo_original>
// kernel: _efdm_loss_jit.1
$region0: #{_efdm_loss_jit.1}
  #allocation0 [shape = 'u32[]', space=smem, size = 0x4, offset = 0x4, fixed_abs, tag = 'smem constant byte address 0x4 - core index']
  #allocation1 [shape = 'u32[144,128]{1,0:T(1,128)}', space=vmem, size = 0x12000, scoped, tag = 'internal scratch']
  %s0 = inlined_call_operand.vmem [shape: bf16[2,3584], index: 0, kind: input, shape index: {}]
  %s1 = inlined_call_operand.vmem [shape: bf16[2,3584], index: 1, kind: input, shape index: {}]
  %s2 = inlined_call_operand.vmem [shape: f32[1,2,2], index: 2, kind: output, shape index: {0}]
  %s3 = inlined_call_operand.vmem [shape: f32[1,2,1], index: 3, kind: output, shape index: {1}]
  %s4 = inlined_call_operand.vmem [shape: f32[1,2,1], index: 4, kind: output, shape index: {2}]
  %s5 = inlined_call_operand.vmem [shape: f32[1,2,1], index: 5, kind: output, shape index: {3}]
  %6 = xla_tuple %s2, %s3, %s4, %s5
  %s7 = sld [smem:[#allocation0]]
  $region53: #{_efdm_loss_jit.1} parent=0
    _
  %s9 = ssub.s32 1, %s7
  %s10 = scalar_select 0, %s9, %s7
  // Predicated region
  $region2: #{_efdm_loss_jit.1} parent=0 // pred_check
    _
  $region3: #{_efdm_loss_jit.1} parent=0 // pred_check_branch
    %12 = sbr.rel (0) target = $region5
  $region4: #{_efdm_loss_jit.1} parent=0 // pred_region
    %s13 = sadd.s32 0, 0
    %s14 = smul.u32 28, %s13
    %p15 = scmp.lt.s32.totalorder %s14, 27
    %s16 = scalar_select %p15, %s14, 27
    %s17 = scalar_lea.vmem %s0, %s16
    %s18 = sadd.s32 0, 0
    %s19 = smul.u32 28, %s18
  $region5: #{_efdm_loss_jit.1} parent=0 // pred_fallthru
    _
  // Predicated region
  $region6: #{_efdm_loss_jit.1} parent=0 // pred_check
    _
  $region7: #{_efdm_loss_jit.1} parent=0 // pred_check_branch
    %21 = sbr.rel (0) target = $region9
  $region8: #{_efdm_loss_jit.1} parent=0 // pred_region
    %s22 = sadd.s32 0, 0
    %s23 = smul.u32 28, %s22
    %p24 = scmp.lt.s32.totalorder %s23, 27
    %s25 = scalar_select %p24, %s23, 27
    %s26 = scalar_lea.vmem %s1, %s25
    %s27 = sadd.s32 0, 0
    %s28 = smul.u32 28, %s27
  $region9: #{_efdm_loss_jit.1} parent=0 // pred_fallthru
    _
  %s29 = sadd.s32 0, 0
  %s30 = smul.u32 28, %s29
  %p31 = scmp.lt.s32.totalorder %s30, 27
  %s32 = scalar_select %p31, %s30, 27
  %s33 = scalar_lea.vmem %s0, %s32
  %s34 = sadd.s32 0, 0
  %s35 = smul.u32 28, %s34
  %p36 = scmp.lt.s32.totalorder %s35, 27
  %s37 = scalar_select %p36, %s35, 27
  %s38 = scalar_lea.vmem %s1, %s37
  %s39 = sadd.s32 0, 0
  %s40 = smul.u32 28, %s39
  %p41 = scmp.lt.s32.totalorder %s40, 27
  %s42 = scalar_select %p41, %s40, 27
  %s43 = scalar_lea.vmem %s0, %s42
  %s44 = sadd.s32 0, 0
  %s45 = smul.u32 28, %s44
  %s46 = sadd.s32 0, 0
  %s47 = smul.u32 28, %s46
  %p48 = scmp.lt.s32.totalorder %s47, 27
  %s49 = scalar_select %p48, %s47, 27
  %s50 = scalar_lea.vmem %s1, %s49
  %s51 = sadd.s32 0, 0
  %s52 = smul.u32 28, %s51
  %p54 = scmp.eq.s32.totalorder 0, 0
  // Predicated region
  $region10: #{_efdm_loss_jit.1} parent=0 // pred_check
    %p55 = pneg %p54
  $region11: #{_efdm_loss_jit.1} parent=0 // pred_check_branch
    %57 = sbr.rel (%p55) target = $region13
  $region12: #{_efdm_loss_jit.1} parent=0 // pred_region
    %vm58 = vcmask 9216
    %59 = vst.msk [vmem:[%s2] sm:$0x3] %vm58, 0.0
    %vm60 = vcmask 1024
    %61 = vst.msk [vmem:[%s3] sm:$0x3] %vm60, 0.0
    %62 = vst.msk [vmem:[%s4] sm:$0x3] %vm60, 0.0
    %63 = vst.msk [vmem:[%s5] sm:$0x3] %vm60, 0.0
  $region13: #{_efdm_loss_jit.1} parent=0 // pred_fallthru
    _
  %v64 = vld [vmem:[%s43] sm:$0xff]
  %v65 = vld [vmem:[%s43 + $0x8] sm:$0xff]
  %v66 = vld [vmem:[%s43 + $0x10] sm:$0xff]
  %v67 = vld [vmem:[%s43 + $0x18] sm:$0xf]
  %v68 = vld [vmem:[%s50] sm:$0xff]
  %v69 = vld [vmem:[%s50 + $0x8] sm:$0xff]
  %v70 = vld [vmem:[%s50 + $0x10] sm:$0xff]
  %v71 = vld [vmem:[%s50 + $0x18] sm:$0xf]
  %v76 = vcombine.high %v64, %v64
  %v78 = vunpack.c.l.s4 1966171168
  %v79 = vunpack.c.0.s8 %v78
  %v80 = vlaneseq
  %v81 = vshrl.u32 %v80, 7
  %v82 = vsub.s32 %v79, %v81
  %v83 = vrot.slane %v64, %v82
  %v85 = vunpack.c.l.s4 1966171168
  %v86 = vunpack.c.0.s8 %v85
  %v87 = vlaneseq
  %v88 = vshrl.u32 %v87, 7
  %v89 = vsub.s32 %v86, %v88
  %v90 = vrot.slane %v76, %v89
  %v91 = vcombine.high %v83, %v83
  %v92 = vcombine.high %v90, %v90
  %v94 = vunpack.c.l.s4 1966171168
  %v95 = vunpack.c.0.s8 %v94
  %v96 = vlaneseq
  %v97 = vshrl.u32 %v96, 7
  %v98 = vsub.s32 %v95, %v97
  %v99 = vrot.slane %v83, %v98
  %v101 = vunpack.c.l.s4 1966171168
  %v102 = vunpack.c.0.s8 %v101
  %v103 = vlaneseq
  %v104 = vshrl.u32 %v103, 7
  %v105 = vsub.s32 %v102, %v104
  %v106 = vrot.slane %v90, %v105
  %v108 = vunpack.c.l.s4 1966171168
  %v109 = vunpack.c.0.s8 %v108
  %v110 = vlaneseq
  %v111 = vshrl.u32 %v110, 7
  %v112 = vsub.s32 %v109, %v111
  %v113 = vrot.slane %v91, %v112
  %v115 = vunpack.c.l.s4 1966171168
  %v116 = vunpack.c.0.s8 %v115
  %v117 = vlaneseq
  %v118 = vshrl.u32 %v117, 7
  %v119 = vsub.s32 %v116, %v118
  %v120 = vrot.slane %v92, %v119
  %v121 = vcombine.high %v99, %v99
  %v122 = vcombine.high %v106, %v106
  %v123 = vcombine.high %v113, %v113
  %v124 = vcombine.high %v120, %v120
  %v125 = vcombine.high %v65, %v65
  %v127 = vunpack.c.l.s4 1966171168
  %v128 = vunpack.c.0.s8 %v127
  %v129 = vlaneseq
  %v130 = vshrl.u32 %v129, 7
  %v131 = vsub.s32 %v128, %v130
  %v132 = vrot.slane %v65, %v131
  %v134 = vunpack.c.l.s4 1966171168
  %v135 = vunpack.c.0.s8 %v134
  %v136 = vlaneseq
  %v137 = vshrl.u32 %v136, 7
  %v138 = vsub.s32 %v135, %v137
  %v139 = vrot.slane %v125, %v138
  %v140 = vcombine.high %v132, %v132
  %v141 = vcombine.high %v139, %v139
  %v143 = vunpack.c.l.s4 1966171168
  %v144 = vunpack.c.0.s8 %v143
  %v145 = vlaneseq
  %v146 = vshrl.u32 %v145, 7
  %v147 = vsub.s32 %v144, %v146
  %v148 = vrot.slane %v132, %v147
  %v150 = vunpack.c.l.s4 1966171168
  %v151 = vunpack.c.0.s8 %v150
  %v152 = vlaneseq
  %v153 = vshrl.u32 %v152, 7
  %v154 = vsub.s32 %v151, %v153
  %v155 = vrot.slane %v139, %v154
  %v157 = vunpack.c.l.s4 1966171168
  %v158 = vunpack.c.0.s8 %v157
  %v159 = vlaneseq
  %v160 = vshrl.u32 %v159, 7
  %v161 = vsub.s32 %v158, %v160
  %v162 = vrot.slane %v140, %v161
  %v164 = vunpack.c.l.s4 1966171168
  %v165 = vunpack.c.0.s8 %v164
  %v166 = vlaneseq
  %v167 = vshrl.u32 %v166, 7
  %v168 = vsub.s32 %v165, %v167
  %v169 = vrot.slane %v141, %v168
  %v170 = vcombine.high %v148, %v148
  %v171 = vcombine.high %v155, %v155
  %v172 = vcombine.high %v162, %v162
  %v173 = vcombine.high %v169, %v169
  %v174 = vcombine.high %v66, %v66
  %v176 = vunpack.c.l.s4 1966171168
  %v177 = vunpack.c.0.s8 %v176
  %v178 = vlaneseq
  %v179 = vshrl.u32 %v178, 7
  %v180 = vsub.s32 %v177, %v179
  %v181 = vrot.slane %v66, %v180
  %v183 = vunpack.c.l.s4 1966171168
  %v184 = vunpack.c.0.s8 %v183
  %v185 = vlaneseq
  %v186 = vshrl.u32 %v185, 7
  %v187 = vsub.s32 %v184, %v186
  %v188 = vrot.slane %v174, %v187
  %v189 = vcombine.high %v181, %v181
  %v190 = vcombine.high %v188, %v188
  %v192 = vunpack.c.l.s4 1966171168
  %v193 = vunpack.c.0.s8 %v192
  %v194 = vlaneseq
  %v195 = vshrl.u32 %v194, 7
  %v196 = vsub.s32 %v193, %v195
  %v197 = vrot.slane %v181, %v196
  %v199 = vunpack.c.l.s4 1966171168
  %v200 = vunpack.c.0.s8 %v199
  %v201 = vlaneseq
  %v202 = vshrl.u32 %v201, 7
  %v203 = vsub.s32 %v200, %v202
  %v204 = vrot.slane %v188, %v203
  %v206 = vunpack.c.l.s4 1966171168
  %v207 = vunpack.c.0.s8 %v206
  %v208 = vlaneseq
  %v209 = vshrl.u32 %v208, 7
  %v210 = vsub.s32 %v207, %v209
  %v211 = vrot.slane %v189, %v210
  %v213 = vunpack.c.l.s4 1966171168
  %v214 = vunpack.c.0.s8 %v213
  %v215 = vlaneseq
  %v216 = vshrl.u32 %v215, 7
  %v217 = vsub.s32 %v214, %v216
  %v218 = vrot.slane %v190, %v217
  %v219 = vcombine.high %v197, %v197
  %v220 = vcombine.high %v204, %v204
  %v221 = vcombine.high %v211, %v211
  %v222 = vcombine.high %v218, %v218
  %v224 = vunpack.c.l.s4 1966171168
  %v225 = vunpack.c.0.s8 %v224
  %v226 = vlaneseq
  %v227 = vshrl.u32 %v226, 7
  %v228 = vsub.s32 %v225, %v227
  %v229 = vrot.slane %v67, %v228
  %v230 = vcombine.high %v229, %v229
  %v232 = vunpack.c.l.s4 1966171168
  %v233 = vunpack.c.0.s8 %v232
  %v234 = vlaneseq
  %v235 = vshrl.u32 %v234, 7
  %v236 = vsub.s32 %v233, %v235
  %v237 = vrot.slane %v229, %v236
  %v239 = vunpack.c.l.s4 1966171168
  %v240 = vunpack.c.0.s8 %v239
  %v241 = vlaneseq
  %v242 = vshrl.u32 %v241, 7
  %v243 = vsub.s32 %v240, %v242
  %v244 = vrot.slane %v230, %v243
  %v245 = vcombine.high %v237, %v237
  %v246 = vcombine.high %v244, %v244
  %v279 = vcombine.high %v68, %v68
  %v281 = vunpack.c.l.s4 1966171168
  %v282 = vunpack.c.0.s8 %v281
  %v283 = vlaneseq
  %v284 = vshrl.u32 %v283, 7
  %v285 = vsub.s32 %v282, %v284
  %v286 = vrot.slane %v68, %v285
  %v288 = vunpack.c.l.s4 1966171168
  %v289 = vunpack.c.0.s8 %v288
  %v290 = vlaneseq
  %v291 = vshrl.u32 %v290, 7
  %v292 = vsub.s32 %v289, %v291
  %v293 = vrot.slane %v279, %v292
  %v294 = vcombine.high %v286, %v286
  %v295 = vcombine.high %v293, %v293
  %v297 = vunpack.c.l.s4 1966171168
  %v298 = vunpack.c.0.s8 %v297
  %v299 = vlaneseq
  %v300 = vshrl.u32 %v299, 7
  %v301 = vsub.s32 %v298, %v300
  %v302 = vrot.slane %v286, %v301
  %v304 = vunpack.c.l.s4 1966171168
  %v305 = vunpack.c.0.s8 %v304
  %v306 = vlaneseq
  %v307 = vshrl.u32 %v306, 7
  %v308 = vsub.s32 %v305, %v307
  %v309 = vrot.slane %v293, %v308
  %v311 = vunpack.c.l.s4 1966171168
  %v312 = vunpack.c.0.s8 %v311
  %v313 = vlaneseq
  %v314 = vshrl.u32 %v313, 7
  %v315 = vsub.s32 %v312, %v314
  %v316 = vrot.slane %v294, %v315
  %v318 = vunpack.c.l.s4 1966171168
  %v319 = vunpack.c.0.s8 %v318
  %v320 = vlaneseq
  %v321 = vshrl.u32 %v320, 7
  %v322 = vsub.s32 %v319, %v321
  %v323 = vrot.slane %v295, %v322
  %v324 = vcombine.high %v302, %v302
  %v325 = vcombine.high %v309, %v309
  %v326 = vcombine.high %v316, %v316
  %v327 = vcombine.high %v323, %v323
  %v328 = vcombine.high %v69, %v69
  %v330 = vunpack.c.l.s4 1966171168
  %v331 = vunpack.c.0.s8 %v330
  %v332 = vlaneseq
  %v333 = vshrl.u32 %v332, 7
  %v334 = vsub.s32 %v331, %v333
  %v335 = vrot.slane %v69, %v334
  %v337 = vunpack.c.l.s4 1966171168
  %v338 = vunpack.c.0.s8 %v337
  %v339 = vlaneseq
  %v340 = vshrl.u32 %v339, 7
  %v341 = vsub.s32 %v338, %v340
  %v342 = vrot.slane %v328, %v341
  %v343 = vcombine.high %v335, %v335
  %v344 = vcombine.high %v342, %v342
  %v346 = vunpack.c.l.s4 1966171168
  %v347 = vunpack.c.0.s8 %v346
  %v348 = vlaneseq
  %v349 = vshrl.u32 %v348, 7
  %v350 = vsub.s32 %v347, %v349
  %v351 = vrot.slane %v335, %v350
  %v353 = vunpack.c.l.s4 1966171168
  %v354 = vunpack.c.0.s8 %v353
  %v355 = vlaneseq
  %v356 = vshrl.u32 %v355, 7
  %v357 = vsub.s32 %v354, %v356
  %v358 = vrot.slane %v342, %v357
  %v360 = vunpack.c.l.s4 1966171168
  %v361 = vunpack.c.0.s8 %v360
  %v362 = vlaneseq
  %v363 = vshrl.u32 %v362, 7
  %v364 = vsub.s32 %v361, %v363
  %v365 = vrot.slane %v343, %v364
  %v367 = vunpack.c.l.s4 1966171168
  %v368 = vunpack.c.0.s8 %v367
  %v369 = vlaneseq
  %v370 = vshrl.u32 %v369, 7
  %v371 = vsub.s32 %v368, %v370
  %v372 = vrot.slane %v344, %v371
  %v373 = vcombine.high %v351, %v351
  %v374 = vcombine.high %v358, %v358
  %v375 = vcombine.high %v365, %v365
  %v376 = vcombine.high %v372, %v372
  %v377 = vcombine.high %v70, %v70
  %v379 = vunpack.c.l.s4 1966171168
  %v380 = vunpack.c.0.s8 %v379
  %v381 = vlaneseq
  %v382 = vshrl.u32 %v381, 7
  %v383 = vsub.s32 %v380, %v382
  %v384 = vrot.slane %v70, %v383
  %v386 = vunpack.c.l.s4 1966171168
  %v387 = vunpack.c.0.s8 %v386
  %v388 = vlaneseq
  %v389 = vshrl.u32 %v388, 7
  %v390 = vsub.s32 %v387, %v389
  %v391 = vrot.slane %v377, %v390
  %v392 = vcombine.high %v384, %v384
  %v393 = vcombine.high %v391, %v391
  %v395 = vunpack.c.l.s4 1966171168
  %v396 = vunpack.c.0.s8 %v395
  %v397 = vlaneseq
  %v398 = vshrl.u32 %v397, 7
  %v399 = vsub.s32 %v396, %v398
  %v400 = vrot.slane %v384, %v399
  %v402 = vunpack.c.l.s4 1966171168
  %v403 = vunpack.c.0.s8 %v402
  %v404 = vlaneseq
  %v405 = vshrl.u32 %v404, 7
  %v406 = vsub.s32 %v403, %v405
  %v407 = vrot.slane %v391, %v406
  %v409 = vunpack.c.l.s4 1966171168
  %v410 = vunpack.c.0.s8 %v409
  %v411 = vlaneseq
  %v412 = vshrl.u32 %v411, 7
  %v413 = vsub.s32 %v410, %v412
  %v414 = vrot.slane %v392, %v413
  %v416 = vunpack.c.l.s4 1966171168
  %v417 = vunpack.c.0.s8 %v416
  %v418 = vlaneseq
  %v419 = vshrl.u32 %v418, 7
  %v420 = vsub.s32 %v417, %v419
  %v421 = vrot.slane %v393, %v420
  %v422 = vcombine.high %v400, %v400
  %v423 = vcombine.high %v407, %v407
  %v424 = vcombine.high %v414, %v414
  %v425 = vcombine.high %v421, %v421
  %v427 = vunpack.c.l.s4 1966171168
  %v428 = vunpack.c.0.s8 %v427
  %v429 = vlaneseq
  %v430 = vshrl.u32 %v429, 7
  %v431 = vsub.s32 %v428, %v430
  %v432 = vrot.slane %v71, %v431
  %v433 = vcombine.high %v432, %v432
  %v435 = vunpack.c.l.s4 1966171168
  %v436 = vunpack.c.0.s8 %v435
  %v437 = vlaneseq
  %v438 = vshrl.u32 %v437, 7
  %v439 = vsub.s32 %v436, %v438
  %v440 = vrot.slane %v432, %v439
  %v442 = vunpack.c.l.s4 1966171168
  %v443 = vunpack.c.0.s8 %v442
  %v444 = vlaneseq
  %v445 = vshrl.u32 %v444, 7
  %v446 = vsub.s32 %v443, %v445
  %v447 = vrot.slane %v433, %v446
  %v448 = vcombine.high %v440, %v440
  %v449 = vcombine.high %v447, %v447
  %478 = vmatprep.subr.bf16.mxu0 0
  %479 = vmatpush1.bf16.xpose.msra.mxu0 0
  %480 = vmatprep.subr.bf16.mxu0 0
  %481 = vmatpush1.bf16.xpose.msra.mxu0 0
  %482 = vmatprep.subr.bf16.mxu0 0
  %483 = vmatpush1.bf16.xpose.msra.mxu0 0
  %484 = vmatprep.subr.bf16.mxu0 0
  %485 = vmatpush1.bf16.xpose.msra.mxu0 0
  %486 = vmatprep.subr.bf16.mxu0 0
  %487 = vmatpush1.bf16.xpose.msra.mxu0 0
  %488 = vmatprep.subr.bf16.mxu0 0
  %489 = vmatpush1.bf16.xpose.msra.mxu0 0
  %490 = vmatprep.subr.bf16.mxu0 0
  %491 = vmatpush1.bf16.xpose.msra.mxu0 0
  %492 = vmatprep.subr.bf16.mxu0 %v316
  %493 = vmatpush1.bf16.xpose.msra.mxu0 %v302
  %494 = vmatprep.subr.bf16.mxu0 0
  %495 = vmatpush2.bf16.xpose.msra.mxu0 0
  %496 = vmatprep.subr.bf16.mxu0 0
  %497 = vmatpush2.bf16.xpose.msra.mxu0 0
  %498 = vmatprep.subr.bf16.mxu0 0
  %499 = vmatpush2.bf16.xpose.msra.mxu0 0
  %500 = vmatprep.subr.bf16.mxu0 0
  %501 = vmatpush2.bf16.xpose.msra.mxu0 0
  %502 = vmatprep.subr.bf16.mxu0 0
  %503 = vmatpush2.bf16.xpose.msra.mxu0 0
  %504 = vmatprep.subr.bf16.mxu0 0
  %505 = vmatpush2.bf16.xpose.msra.mxu0 0
  %506 = vmatprep.subr.bf16.mxu0 0
  %507 = vmatpush2.bf16.xpose.msra.mxu0 0
  %508 = vmatprep.subr.bf16.mxu0 0
  %509 = vmatpush2.bf16.xpose.msra.mxu0 0
  %510 = vmatprep.mubr.bf16.mxu0 %v113
  %511 = vmatmul.mubr.bf16.gmra.mxu0 %v99
  %v512 = vpop.f32.mrf.mxu0
  %v513 = vadd.f32 0.0, %v512
  %v514 = vpop.f32.mrf.mxu0
  %v515 = vpop.f32.mrf.mxu0
  %v516 = vpop.f32.mrf.mxu0
  %517 = vdwg.mxu0
  %518 = vmatprep.subr.bf16.mxu0 0
  %519 = vmatpush1.bf16.xpose.msra.mxu0 0
  %520 = vmatprep.subr.bf16.mxu0 0
  %521 = vmatpush1.bf16.xpose.msra.mxu0 0
  %522 = vmatprep.subr.bf16.mxu0 0
  %523 = vmatpush1.bf16.xpose.msra.mxu0 0
  %524 = vmatprep.subr.bf16.mxu0 0
  %525 = vmatpush1.bf16.xpose.msra.mxu0 0
  %526 = vmatprep.subr.bf16.mxu0 0
  %527 = vmatpush1.bf16.xpose.msra.mxu0 0
  %528 = vmatprep.subr.bf16.mxu0 0
  %529 = vmatpush1.bf16.xpose.msra.mxu0 0
  %530 = vmatprep.subr.bf16.mxu0 0
  %531 = vmatpush1.bf16.xpose.msra.mxu0 0
  %532 = vmatprep.subr.bf16.mxu0 %v326
  %533 = vmatpush1.bf16.xpose.msra.mxu0 %v324
  %534 = vmatprep.subr.bf16.mxu0 0
  %535 = vmatpush2.bf16.xpose.msra.mxu0 0
  %536 = vmatprep.subr.bf16.mxu0 0
  %537 = vmatpush2.bf16.xpose.msra.mxu0 0
  %538 = vmatprep.subr.bf16.mxu0 0
  %539 = vmatpush2.bf16.xpose.msra.mxu0 0
  %540 = vmatprep.subr.bf16.mxu0 0
  %541 = vmatpush2.bf16.xpose.msra.mxu0 0
  %542 = vmatprep.subr.bf16.mxu0 0
  %543 = vmatpush2.bf16.xpose.msra.mxu0 0
  %544 = vmatprep.subr.bf16.mxu0 0
  %545 = vmatpush2.bf16.xpose.msra.mxu0 0
  %546 = vmatprep.subr.bf16.mxu0 0
  %547 = vmatpush2.bf16.xpose.msra.mxu0 0
  %548 = vmatprep.subr.bf16.mxu0 0
  %549 = vmatpush2.bf16.xpose.msra.mxu0 0
  %550 = vmatprep.mubr.bf16.mxu0 %v123
  %551 = vmatmul.mubr.bf16.gmra.mxu0 %v121
  %v552 = vpop.f32.mrf.mxu0
  %v553 = vadd.f32 %v513, %v552
  %v554 = vpop.f32.mrf.mxu0
  %v555 = vpop.f32.mrf.mxu0
  %v556 = vpop.f32.mrf.mxu0
  %557 = vdwg.mxu0
  %558 = vmatprep.subr.bf16.mxu0 0
  %559 = vmatpush1.bf16.xpose.msra.mxu0 0
  %560 = vmatprep.subr.bf16.mxu0 0
  %561 = vmatpush1.bf16.xpose.msra.mxu0 0
  %562 = vmatprep.subr.bf16.mxu0 0
  %563 = vmatpush1.bf16.xpose.msra.mxu0 0
  %564 = vmatprep.subr.bf16.mxu0 0
  %565 = vmatpush1.bf16.xpose.msra.mxu0 0
  %566 = vmatprep.subr.bf16.mxu0 0
  %567 = vmatpush1.bf16.xpose.msra.mxu0 0
  %568 = vmatprep.subr.bf16.mxu0 0
  %569 = vmatpush1.bf16.xpose.msra.mxu0 0
  %570 = vmatprep.subr.bf16.mxu0 0
  %571 = vmatpush1.bf16.xpose.msra.mxu0 0
  %572 = vmatprep.subr.bf16.mxu0 %v323
  %573 = vmatpush1.bf16.xpose.msra.mxu0 %v309
  %574 = vmatprep.subr.bf16.mxu0 0
  %575 = vmatpush2.bf16.xpose.msra.mxu0 0
  %576 = vmatprep.subr.bf16.mxu0 0
  %577 = vmatpush2.bf16.xpose.msra.mxu0 0
  %578 = vmatprep.subr.bf16.mxu0 0
  %579 = vmatpush2.bf16.xpose.msra.mxu0 0
  %580 = vmatprep.subr.bf16.mxu0 0
  %581 = vmatpush2.bf16.xpose.msra.mxu0 0
  %582 = vmatprep.subr.bf16.mxu0 0
  %583 = vmatpush2.bf16.xpose.msra.mxu0 0
  %584 = vmatprep.subr.bf16.mxu0 0
  %585 = vmatpush2.bf16.xpose.msra.mxu0 0
  %586 = vmatprep.subr.bf16.mxu0 0
  %587 = vmatpush2.bf16.xpose.msra.mxu0 0
  %588 = vmatprep.subr.bf16.mxu0 0
  %589 = vmatpush2.bf16.xpose.msra.mxu0 0
  %590 = vmatprep.mubr.bf16.mxu0 %v120
  %591 = vmatmul.mubr.bf16.gmra.mxu0 %v106
  %v592 = vpop.f32.mrf.mxu0
  %v593 = vadd.f32 %v553, %v592
  %v594 = vpop.f32.mrf.mxu0
  %v595 = vpop.f32.mrf.mxu0
  %v596 = vpop.f32.mrf.mxu0
  %597 = vdwg.mxu0
  %598 = vmatprep.subr.bf16.mxu0 0
  %599 = vmatpush1.bf16.xpose.msra.mxu0 0
  %600 = vmatprep.subr.bf16.mxu0 0
  %601 = vmatpush1.bf16.xpose.msra.mxu0 0
  %602 = vmatprep.subr.bf16.mxu0 0
  %603 = vmatpush1.bf16.xpose.msra.mxu0 0
  %604 = vmatprep.subr.bf16.mxu0 0
  %605 = vmatpush1.bf16.xpose.msra.mxu0 0
  %606 = vmatprep.subr.bf16.mxu0 0
  %607 = vmatpush1.bf16.xpose.msra.mxu0 0
  %608 = vmatprep.subr.bf16.mxu0 0
  %609 = vmatpush1.bf16.xpose.msra.mxu0 0
  %610 = vmatprep.subr.bf16.mxu0 0
  %611 = vmatpush1.bf16.xpose.msra.mxu0 0
  %612 = vmatprep.subr.bf16.mxu0 %v327
  %613 = vmatpush1.bf16.xpose.msra.mxu0 %v325
  %614 = vmatprep.subr.bf16.mxu0 0
  %615 = vmatpush2.bf16.xpose.msra.mxu0 0
  %616 = vmatprep.subr.bf16.mxu0 0
  %617 = vmatpush2.bf16.xpose.msra.mxu0 0
  %618 = vmatprep.subr.bf16.mxu0 0
  %619 = vmatpush2.bf16.xpose.msra.mxu0 0
  %620 = vmatprep.subr.bf16.mxu0 0
  %621 = vmatpush2.bf16.xpose.msra.mxu0 0
  %622 = vmatprep.subr.bf16.mxu0 0
  %623 = vmatpush2.bf16.xpose.msra.mxu0 0
  %624 = vmatprep.subr.bf16.mxu0 0
  %625 = vmatpush2.bf16.xpose.msra.mxu0 0
  %626 = vmatprep.subr.bf16.mxu0 0
  %627 = vmatpush2.bf16.xpose.msra.mxu0 0
  %628 = vmatprep.subr.bf16.mxu0 0
  %629 = vmatpush2.bf16.xpose.msra.mxu0 0
  %630 = vmatprep.mubr.bf16.mxu0 %v124
  %631 = vmatmul.mubr.bf16.gmra.mxu0 %v122
  %v632 = vpop.f32.mrf.mxu0
  %v633 = vadd.f32 %v593, %v632
  %v634 = vpop.f32.mrf.mxu0
  %v635 = vpop.f32.mrf.mxu0
  %v636 = vpop.f32.mrf.mxu0
  %637 = vdwg.mxu0
  %638 = vmatprep.subr.bf16.mxu0 0
  %639 = vmatpush1.bf16.xpose.msra.mxu0 0
  %640 = vmatprep.subr.bf16.mxu0 0
  %641 = vmatpush1.bf16.xpose.msra.mxu0 0
  %642 = vmatprep.subr.bf16.mxu0 0
  %643 = vmatpush1.bf16.xpose.msra.mxu0 0
  %644 = vmatprep.subr.bf16.mxu0 0
  %645 = vmatpush1.bf16.xpose.msra.mxu0 0
  %646 = vmatprep.subr.bf16.mxu0 0
  %647 = vmatpush1.bf16.xpose.msra.mxu0 0
  %648 = vmatprep.subr.bf16.mxu0 0
  %649 = vmatpush1.bf16.xpose.msra.mxu0 0
  %650 = vmatprep.subr.bf16.mxu0 0
  %651 = vmatpush1.bf16.xpose.msra.mxu0 0
  %652 = vmatprep.subr.bf16.mxu0 %v365
  %653 = vmatpush1.bf16.xpose.msra.mxu0 %v351
  %654 = vmatprep.subr.bf16.mxu0 0
  %655 = vmatpush2.bf16.xpose.msra.mxu0 0
  %656 = vmatprep.subr.bf16.mxu0 0
  %657 = vmatpush2.bf16.xpose.msra.mxu0 0
  %658 = vmatprep.subr.bf16.mxu0 0
  %659 = vmatpush2.bf16.xpose.msra.mxu0 0
  %660 = vmatprep.subr.bf16.mxu0 0
  %661 = vmatpush2.bf16.xpose.msra.mxu0 0
  %662 = vmatprep.subr.bf16.mxu0 0
  %663 = vmatpush2.bf16.xpose.msra.mxu0 0
  %664 = vmatprep.subr.bf16.mxu0 0
  %665 = vmatpush2.bf16.xpose.msra.mxu0 0
  %666 = vmatprep.subr.bf16.mxu0 0
  %667 = vmatpush2.bf16.xpose.msra.mxu0 0
  %668 = vmatprep.subr.bf16.mxu0 0
  %669 = vmatpush2.bf16.xpose.msra.mxu0 0
  %670 = vmatprep.mubr.bf16.mxu0 %v162
  %671 = vmatmul.mubr.bf16.gmra.mxu0 %v148
  %v672 = vpop.f32.mrf.mxu0
  %v673 = vadd.f32 %v633, %v672
  %v674 = vpop.f32.mrf.mxu0
  %v675 = vpop.f32.mrf.mxu0
  %v676 = vpop.f32.mrf.mxu0
  %677 = vdwg.mxu0
  %678 = vmatprep.subr.bf16.mxu0 0
  %679 = vmatpush1.bf16.xpose.msra.mxu0 0
  %680 = vmatprep.subr.bf16.mxu0 0
  %681 = vmatpush1.bf16.xpose.msra.mxu0 0
  %682 = vmatprep.subr.bf16.mxu0 0
  %683 = vmatpush1.bf16.xpose.msra.mxu0 0
  %684 = vmatprep.subr.bf16.mxu0 0
  %685 = vmatpush1.bf16.xpose.msra.mxu0 0
  %686 = vmatprep.subr.bf16.mxu0 0
  %687 = vmatpush1.bf16.xpose.msra.mxu0 0
  %688 = vmatprep.subr.bf16.mxu0 0
  %689 = vmatpush1.bf16.xpose.msra.mxu0 0
  %690 = vmatprep.subr.bf16.mxu0 0
  %691 = vmatpush1.bf16.xpose.msra.mxu0 0
  %692 = vmatprep.subr.bf16.mxu0 %v375
  %693 = vmatpush1.bf16.xpose.msra.mxu0 %v373
  %694 = vmatprep.subr.bf16.mxu0 0
  %695 = vmatpush2.bf16.xpose.msra.mxu0 0
  %696 = vmatprep.subr.bf16.mxu0 0
  %697 = vmatpush2.bf16.xpose.msra.mxu0 0
  %698 = vmatprep.subr.bf16.mxu0 0
  %699 = vmatpush2.bf16.xpose.msra.mxu0 0
  %700 = vmatprep.subr.bf16.mxu0 0
  %701 = vmatpush2.bf16.xpose.msra.mxu0 0
  %702 = vmatprep.subr.bf16.mxu0 0
  %703 = vmatpush2.bf16.xpose.msra.mxu0 0
  %704 = vmatprep.subr.bf16.mxu0 0
  %705 = vmatpush2.bf16.xpose.msra.mxu0 0
  %706 = vmatprep.subr.bf16.mxu0 0
  %707 = vmatpush2.bf16.xpose.msra.mxu0 0
  %708 = vmatprep.subr.bf16.mxu0 0
  %709 = vmatpush2.bf16.xpose.msra.mxu0 0
  %710 = vmatprep.mubr.bf16.mxu0 %v172
  %711 = vmatmul.mubr.bf16.gmra.mxu0 %v170
  %v712 = vpop.f32.mrf.mxu0
  %v713 = vadd.f32 %v673, %v712
  %v714 = vpop.f32.mrf.mxu0
  %v715 = vpop.f32.mrf.mxu0
  %v716 = vpop.f32.mrf.mxu0
  %717 = vdwg.mxu0
  %718 = vmatprep.subr.bf16.mxu0 0
  %719 = vmatpush1.bf16.xpose.msra.mxu0 0
  %720 = vmatprep.subr.bf16.mxu0 0
  %721 = vmatpush1.bf16.xpose.msra.mxu0 0
  %722 = vmatprep.subr.bf16.mxu0 0
  %723 = vmatpush1.bf16.xpose.msra.mxu0 0
  %724 = vmatprep.subr.bf16.mxu0 0
  %725 = vmatpush1.bf16.xpose.msra.mxu0 0
  %726 = vmatprep.subr.bf16.mxu0 0
  %727 = vmatpush1.bf16.xpose.msra.mxu0 0
  %728 = vmatprep.subr.bf16.mxu0 0
  %729 = vmatpush1.bf16.xpose.msra.mxu0 0
  %730 = vmatprep.subr.bf16.mxu0 0
  %731 = vmatpush1.bf16.xpose.msra.mxu0 0
  %732 = vmatprep.subr.bf16.mxu0 %v372
  %733 = vmatpush1.bf16.xpose.msra.mxu0 %v358
  %734 = vmatprep.subr.bf16.mxu0 0
  %735 = vmatpush2.bf16.xpose.msra.mxu0 0
  %736 = vmatprep.subr.bf16.mxu0 0
  %737 = vmatpush2.bf16.xpose.msra.mxu0 0
  %738 = vmatprep.subr.bf16.mxu0 0
  %739 = vmatpush2.bf16.xpose.msra.mxu0 0
  %740 = vmatprep.subr.bf16.mxu0 0
  %741 = vmatpush2.bf16.xpose.msra.mxu0 0
  %742 = vmatprep.subr.bf16.mxu0 0
  %743 = vmatpush2.bf16.xpose.msra.mxu0 0
  %744 = vmatprep.subr.bf16.mxu0 0
  %745 = vmatpush2.bf16.xpose.msra.mxu0 0
  %746 = vmatprep.subr.bf16.mxu0 0
  %747 = vmatpush2.bf16.xpose.msra.mxu0 0
  %748 = vmatprep.subr.bf16.mxu0 0
  %749 = vmatpush2.bf16.xpose.msra.mxu0 0
  %750 = vmatprep.mubr.bf16.mxu0 %v169
  %751 = vmatmul.mubr.bf16.gmra.mxu0 %v155
  %v752 = vpop.f32.mrf.mxu0
  %v753 = vadd.f32 %v713, %v752
  %v754 = vpop.f32.mrf.mxu0
  %v755 = vpop.f32.mrf.mxu0
  %v756 = vpop.f32.mrf.mxu0
  %757 = vdwg.mxu0
  %758 = vmatprep.subr.bf16.mxu0 0
  %759 = vmatpush1.bf16.xpose.msra.mxu0 0
  %760 = vmatprep.subr.bf16.mxu0 0
  %761 = vmatpush1.bf16.xpose.msra.mxu0 0
  %762 = vmatprep.subr.bf16.mxu0 0
  %763 = vmatpush1.bf16.xpose.msra.mxu0 0
  %764 = vmatprep.subr.bf16.mxu0 0
  %765 = vmatpush1.bf16.xpose.msra.mxu0 0
  %766 = vmatprep.subr.bf16.mxu0 0
  %767 = vmatpush1.bf16.xpose.msra.mxu0 0
  %768 = vmatprep.subr.bf16.mxu0 0
  %769 = vmatpush1.bf16.xpose.msra.mxu0 0
  %770 = vmatprep.subr.bf16.mxu0 0
  %771 = vmatpush1.bf16.xpose.msra.mxu0 0
  %772 = vmatprep.subr.bf16.mxu0 %v376
  %773 = vmatpush1.bf16.xpose.msra.mxu0 %v374
  %774 = vmatprep.subr.bf16.mxu0 0
  %775 = vmatpush2.bf16.xpose.msra.mxu0 0
  %776 = vmatprep.subr.bf16.mxu0 0
  %777 = vmatpush2.bf16.xpose.msra.mxu0 0
  %778 = vmatprep.subr.bf16.mxu0 0
  %779 = vmatpush2.bf16.xpose.msra.mxu0 0
  %780 = vmatprep.subr.bf16.mxu0 0
  %781 = vmatpush2.bf16.xpose.msra.mxu0 0
  %782 = vmatprep.subr.bf16.mxu0 0
  %783 = vmatpush2.bf16.xpose.msra.mxu0 0
  %784 = vmatprep.subr.bf16.mxu0 0
  %785 = vmatpush2.bf16.xpose.msra.mxu0 0
  %786 = vmatprep.subr.bf16.mxu0 0
  %787 = vmatpush2.bf16.xpose.msra.mxu0 0
  %788 = vmatprep.subr.bf16.mxu0 0
  %789 = vmatpush2.bf16.xpose.msra.mxu0 0
  %790 = vmatprep.mubr.bf16.mxu0 %v173
  %791 = vmatmul.mubr.bf16.gmra.mxu0 %v171
  %v792 = vpop.f32.mrf.mxu0
  %v793 = vadd.f32 %v753, %v792
  %v794 = vpop.f32.mrf.mxu0
  %v795 = vpop.f32.mrf.mxu0
  %v796 = vpop.f32.mrf.mxu0
  %797 = vdwg.mxu0
  %798 = vmatprep.subr.bf16.mxu0 0
  %799 = vmatpush1.bf16.xpose.msra.mxu0 0
  %800 = vmatprep.subr.bf16.mxu0 0
  %801 = vmatpush1.bf16.xpose.msra.mxu0 0
  %802 = vmatprep.subr.bf16.mxu0 0
  %803 = vmatpush1.bf16.xpose.msra.mxu0 0
  %804 = vmatprep.subr.bf16.mxu0 0
  %805 = vmatpush1.bf16.xpose.msra.mxu0 0
  %806 = vmatprep.subr.bf16.mxu0 0
  %807 = vmatpush1.bf16.xpose.msra.mxu0 0
  %808 = vmatprep.subr.bf16.mxu0 0
  %809 = vmatpush1.bf16.xpose.msra.mxu0 0
  %810 = vmatprep.subr.bf16.mxu0 0
  %811 = vmatpush1.bf16.xpose.msra.mxu0 0
  %812 = vmatprep.subr.bf16.mxu0 %v414
  %813 = vmatpush1.bf16.xpose.msra.mxu0 %v400
  %814 = vmatprep.subr.bf16.mxu0 0
  %815 = vmatpush2.bf16.xpose.msra.mxu0 0
  %816 = vmatprep.subr.bf16.mxu0 0
  %817 = vmatpush2.bf16.xpose.msra.mxu0 0
  %818 = vmatprep.subr.bf16.mxu0 0
  %819 = vmatpush2.bf16.xpose.msra.mxu0 0
  %820 = vmatprep.subr.bf16.mxu0 0
  %821 = vmatpush2.bf16.xpose.msra.mxu0 0
  %822 = vmatprep.subr.bf16.mxu0 0
  %823 = vmatpush2.bf16.xpose.msra.mxu0 0
  %824 = vmatprep.subr.bf16.mxu0 0
  %825 = vmatpush2.bf16.xpose.msra.mxu0 0
  %826 = vmatprep.subr.bf16.mxu0 0
  %827 = vmatpush2.bf16.xpose.msra.mxu0 0
  %828 = vmatprep.subr.bf16.mxu0 0
  %829 = vmatpush2.bf16.xpose.msra.mxu0 0
  %830 = vmatprep.mubr.bf16.mxu0 %v211
  %831 = vmatmul.mubr.bf16.gmra.mxu0 %v197
  %v832 = vpop.f32.mrf.mxu0
  %v833 = vadd.f32 %v793, %v832
  %v834 = vpop.f32.mrf.mxu0
  %v835 = vpop.f32.mrf.mxu0
  %v836 = vpop.f32.mrf.mxu0
  %837 = vdwg.mxu0
  %838 = vmatprep.subr.bf16.mxu0 0
  %839 = vmatpush1.bf16.xpose.msra.mxu0 0
  %840 = vmatprep.subr.bf16.mxu0 0
  %841 = vmatpush1.bf16.xpose.msra.mxu0 0
  %842 = vmatprep.subr.bf16.mxu0 0
  %843 = vmatpush1.bf16.xpose.msra.mxu0 0
  %844 = vmatprep.subr.bf16.mxu0 0
  %845 = vmatpush1.bf16.xpose.msra.mxu0 0
  %846 = vmatprep.subr.bf16.mxu0 0
  %847 = vmatpush1.bf16.xpose.msra.mxu0 0
  %848 = vmatprep.subr.bf16.mxu0 0
  %849 = vmatpush1.bf16.xpose.msra.mxu0 0
  %850 = vmatprep.subr.bf16.mxu0 0
  %851 = vmatpush1.bf16.xpose.msra.mxu0 0
  %852 = vmatprep.subr.bf16.mxu0 %v424
  %853 = vmatpush1.bf16.xpose.msra.mxu0 %v422
  %854 = vmatprep.subr.bf16.mxu0 0
  %855 = vmatpush2.bf16.xpose.msra.mxu0 0
  %856 = vmatprep.subr.bf16.mxu0 0
  %857 = vmatpush2.bf16.xpose.msra.mxu0 0
  %858 = vmatprep.subr.bf16.mxu0 0
  %859 = vmatpush2.bf16.xpose.msra.mxu0 0
  %860 = vmatprep.subr.bf16.mxu0 0
  %861 = vmatpush2.bf16.xpose.msra.mxu0 0
  %862 = vmatprep.subr.bf16.mxu0 0
  %863 = vmatpush2.bf16.xpose.msra.mxu0 0
  %864 = vmatprep.subr.bf16.mxu0 0
  %865 = vmatpush2.bf16.xpose.msra.mxu0 0
  %866 = vmatprep.subr.bf16.mxu0 0
  %867 = vmatpush2.bf16.xpose.msra.mxu0 0
  %868 = vmatprep.subr.bf16.mxu0 0
  %869 = vmatpush2.bf16.xpose.msra.mxu0 0
  %870 = vmatprep.mubr.bf16.mxu0 %v221
  %871 = vmatmul.mubr.bf16.gmra.mxu0 %v219
  %v872 = vpop.f32.mrf.mxu0
  %v873 = vadd.f32 %v833, %v872
  %v874 = vpop.f32.mrf.mxu0
  %v875 = vpop.f32.mrf.mxu0
  %v876 = vpop.f32.mrf.mxu0
  %877 = vdwg.mxu0
  %878 = vmatprep.subr.bf16.mxu0 0
  %879 = vmatpush1.bf16.xpose.msra.mxu0 0
  %880 = vmatprep.subr.bf16.mxu0 0
  %881 = vmatpush1.bf16.xpose.msra.mxu0 0
  %882 = vmatprep.subr.bf16.mxu0 0
  %883 = vmatpush1.bf16.xpose.msra.mxu0 0
  %884 = vmatprep.subr.bf16.mxu0 0
  %885 = vmatpush1.bf16.xpose.msra.mxu0 0
  %886 = vmatprep.subr.bf16.mxu0 0
  %887 = vmatpush1.bf16.xpose.msra.mxu0 0
  %888 = vmatprep.subr.bf16.mxu0 0
  %889 = vmatpush1.bf16.xpose.msra.mxu0 0
  %890 = vmatprep.subr.bf16.mxu0 0
  %891 = vmatpush1.bf16.xpose.msra.mxu0 0
  %892 = vmatprep.subr.bf16.mxu0 %v421
  %893 = vmatpush1.bf16.xpose.msra.mxu0 %v407
  %894 = vmatprep.subr.bf16.mxu0 0
  %895 = vmatpush2.bf16.xpose.msra.mxu0 0
  %896 = vmatprep.subr.bf16.mxu0 0
  %897 = vmatpush2.bf16.xpose.msra.mxu0 0
  %898 = vmatprep.subr.bf16.mxu0 0
  %899 = vmatpush2.bf16.xpose.msra.mxu0 0
  %900 = vmatprep.subr.bf16.mxu0 0
  %901 = vmatpush2.bf16.xpose.msra.mxu0 0
  %902 = vmatprep.subr.bf16.mxu0 0
  %903 = vmatpush2.bf16.xpose.msra.mxu0 0
  %904 = vmatprep.subr.bf16.mxu0 0
  %905 = vmatpush2.bf16.xpose.msra.mxu0 0
  %906 = vmatprep.subr.bf16.mxu0 0
  %907 = vmatpush2.bf16.xpose.msra.mxu0 0
  %908 = vmatprep.subr.bf16.mxu0 0
  %909 = vmatpush2.bf16.xpose.msra.mxu0 0
  %910 = vmatprep.mubr.bf16.mxu0 %v218
  %911 = vmatmul.mubr.bf16.gmra.mxu0 %v204
  %v912 = vpop.f32.mrf.mxu0
  %v913 = vadd.f32 %v873, %v912
  %v914 = vpop.f32.mrf.mxu0
  %v915 = vpop.f32.mrf.mxu0
  %v916 = vpop.f32.mrf.mxu0
  %917 = vdwg.mxu0
  %918 = vmatprep.subr.bf16.mxu0 0
  %919 = vmatpush1.bf16.xpose.msra.mxu0 0
  %920 = vmatprep.subr.bf16.mxu0 0
  %921 = vmatpush1.bf16.xpose.msra.mxu0 0
  %922 = vmatprep.subr.bf16.mxu0 0
  %923 = vmatpush1.bf16.xpose.msra.mxu0 0
  %924 = vmatprep.subr.bf16.mxu0 0
  %925 = vmatpush1.bf16.xpose.msra.mxu0 0
  %926 = vmatprep.subr.bf16.mxu0 0
  %927 = vmatpush1.bf16.xpose.msra.mxu0 0
  %928 = vmatprep.subr.bf16.mxu0 0
  %929 = vmatpush1.bf16.xpose.msra.mxu0 0
  %930 = vmatprep.subr.bf16.mxu0 0
  %931 = vmatpush1.bf16.xpose.msra.mxu0 0
  %932 = vmatprep.subr.bf16.mxu0 %v425
  %933 = vmatpush1.bf16.xpose.msra.mxu0 %v423
  %934 = vmatprep.subr.bf16.mxu0 0
  %935 = vmatpush2.bf16.xpose.msra.mxu0 0
  %936 = vmatprep.subr.bf16.mxu0 0
  %937 = vmatpush2.bf16.xpose.msra.mxu0 0
  %938 = vmatprep.subr.bf16.mxu0 0
  %939 = vmatpush2.bf16.xpose.msra.mxu0 0
  %940 = vmatprep.subr.bf16.mxu0 0
  %941 = vmatpush2.bf16.xpose.msra.mxu0 0
  %942 = vmatprep.subr.bf16.mxu0 0
  %943 = vmatpush2.bf16.xpose.msra.mxu0 0
  %944 = vmatprep.subr.bf16.mxu0 0
  %945 = vmatpush2.bf16.xpose.msra.mxu0 0
  %946 = vmatprep.subr.bf16.mxu0 0
  %947 = vmatpush2.bf16.xpose.msra.mxu0 0
  %948 = vmatprep.subr.bf16.mxu0 0
  %949 = vmatpush2.bf16.xpose.msra.mxu0 0
  %950 = vmatprep.mubr.bf16.mxu0 %v222
  %951 = vmatmul.mubr.bf16.gmra.mxu0 %v220
  %v952 = vpop.f32.mrf.mxu0
  %v953 = vadd.f32 %v913, %v952
  %v954 = vpop.f32.mrf.mxu0
  %v955 = vpop.f32.mrf.mxu0
  %v956 = vpop.f32.mrf.mxu0
  %957 = vdwg.mxu0
  %958 = vmatprep.subr.bf16.mxu0 0
  %959 = vmatpush1.bf16.xpose.msra.mxu0 0
  %960 = vmatprep.subr.bf16.mxu0 0
  %961 = vmatpush1.bf16.xpose.msra.mxu0 0
  %962 = vmatprep.subr.bf16.mxu0 0
  %963 = vmatpush1.bf16.xpose.msra.mxu0 0
  %964 = vmatprep.subr.bf16.mxu0 0
  %965 = vmatpush1.bf16.xpose.msra.mxu0 0
  %966 = vmatprep.subr.bf16.mxu0 0
  %967 = vmatpush1.bf16.xpose.msra.mxu0 0
  %968 = vmatprep.subr.bf16.mxu0 0
  %969 = vmatpush1.bf16.xpose.msra.mxu0 0
  %970 = vmatprep.subr.bf16.mxu0 0
  %971 = vmatpush1.bf16.xpose.msra.mxu0 0
  %972 = vmatprep.subr.bf16.mxu0 %v447
  %973 = vmatpush1.bf16.xpose.msra.mxu0 %v440
  %974 = vmatprep.subr.bf16.mxu0 0
  %975 = vmatpush2.bf16.xpose.msra.mxu0 0
  %976 = vmatprep.subr.bf16.mxu0 0
  %977 = vmatpush2.bf16.xpose.msra.mxu0 0
  %978 = vmatprep.subr.bf16.mxu0 0
  %979 = vmatpush2.bf16.xpose.msra.mxu0 0
  %980 = vmatprep.subr.bf16.mxu0 0
  %981 = vmatpush2.bf16.xpose.msra.mxu0 0
  %982 = vmatprep.subr.bf16.mxu0 0
  %983 = vmatpush2.bf16.xpose.msra.mxu0 0
  %984 = vmatprep.subr.bf16.mxu0 0
  %985 = vmatpush2.bf16.xpose.msra.mxu0 0
  %986 = vmatprep.subr.bf16.mxu0 0
  %987 = vmatpush2.bf16.xpose.msra.mxu0 0
  %988 = vmatprep.subr.bf16.mxu0 0
  %989 = vmatpush2.bf16.xpose.msra.mxu0 0
  %990 = vmatprep.mubr.bf16.mxu0 %v244
  %991 = vmatmul.mubr.bf16.gmra.mxu0 %v237
  %v992 = vpop.f32.mrf.mxu0
  %v993 = vadd.f32 %v953, %v992
  %v994 = vpop.f32.mrf.mxu0
  %v995 = vpop.f32.mrf.mxu0
  %v996 = vpop.f32.mrf.mxu0
  %997 = vdwg.mxu0
  %998 = vmatprep.subr.bf16.mxu0 0
  %999 = vmatpush1.bf16.xpose.msra.mxu0 0
  %1000 = vmatprep.subr.bf16.mxu0 0
  %1001 = vmatpush1.bf16.xpose.msra.mxu0 0
  %1002 = vmatprep.subr.bf16.mxu0 0
  %1003 = vmatpush1.bf16.xpose.msra.mxu0 0
  %1004 = vmatprep.subr.bf16.mxu0 0
  %1005 = vmatpush1.bf16.xpose.msra.mxu0 0
  %1006 = vmatprep.subr.bf16.mxu0 0
  %1007 = vmatpush1.bf16.xpose.msra.mxu0 0
  %1008 = vmatprep.subr.bf16.mxu0 0
  %1009 = vmatpush1.bf16.xpose.msra.mxu0 0
  %1010 = vmatprep.subr.bf16.mxu0 0
  %1011 = vmatpush1.bf16.xpose.msra.mxu0 0
  %1012 = vmatprep.subr.bf16.mxu0 %v449
  %1013 = vmatpush1.bf16.xpose.msra.mxu0 %v448
  %1014 = vmatprep.subr.bf16.mxu0 0
  %1015 = vmatpush2.bf16.xpose.msra.mxu0 0
  %1016 = vmatprep.subr.bf16.mxu0 0
  %1017 = vmatpush2.bf16.xpose.msra.mxu0 0
  %1018 = vmatprep.subr.bf16.mxu0 0
  %1019 = vmatpush2.bf16.xpose.msra.mxu0 0
  %1020 = vmatprep.subr.bf16.mxu0 0
  %1021 = vmatpush2.bf16.xpose.msra.mxu0 0
  %1022 = vmatprep.subr.bf16.mxu0 0
  %1023 = vmatpush2.bf16.xpose.msra.mxu0 0
  %1024 = vmatprep.subr.bf16.mxu0 0
  %1025 = vmatpush2.bf16.xpose.msra.mxu0 0
  %1026 = vmatprep.subr.bf16.mxu0 0
  %1027 = vmatpush2.bf16.xpose.msra.mxu0 0
  %1028 = vmatprep.subr.bf16.mxu0 0
  %1029 = vmatpush2.bf16.xpose.msra.mxu0 0
  %1030 = vmatprep.mubr.bf16.mxu0 %v246
  %1031 = vmatmul.mubr.bf16.gmra.mxu0 %v245
  %v1032 = vpop.f32.mrf.mxu0
  %v1033 = vadd.f32 %v993, %v1032
  %v1034 = vpop.f32.mrf.mxu0
  %v1035 = vpop.f32.mrf.mxu0
  %v1036 = vpop.f32.mrf.mxu0
  %1037 = vdwg.mxu0
  %v1038 = vld [vmem:[%s2] sm:$0x3]
  %v1039 = vadd.f32 %v1038, %v1033
  %vm1040 = vcmask 9216
  %1041 = vst.msk [vmem:[%s2] sm:$0x3] %vm1040, %v1039
  loop: start=0, step=1, limit=7
  $region14: #{_efdm_loss_jit.1} parent=0 // loop_pre_header
    _
  $region15: #{_efdm_loss_jit.1} parent=0 // loop_header
    %s1043 = sphi 0, %s1047
    %p1044 = scmp.ge.s32.totalorder %s1043, 7
    %v1048 = vphi 0.0, %v1094
    %v1049 = vphi 0.0, %v1127
    %v1050 = vphi 0.0, %v1160
  $region16: #{_efdm_loss_jit.1} parent=0 // loop_header_branch
    %1046 = sbr.rel (%p1044) target = $region20
  $region17: #{_efdm_loss_jit.1} parent=0 // loop_body
    %s1051 = smul.u32 %s1043, 512
    %s1052 = sshra.s32 %s1051, 7
    %s1053 = sand.u32 %s1051, 127
    %s1054 = scalar_lea.vmem %s43, %s1052
    %v1055 = vld [vmem:[%s1054] sm:$0xf]
    %v1056 = vunpack.c.l.bf16 %v1055
    %s1057 = scalar_lea.vmem %s50, %s1052
    %v1058 = vld [vmem:[%s1057] sm:$0xf]
    %v1059 = vunpack.c.l.bf16 %v1058
    %v1060 = vsub.f32 %v1056, %v1059
    %v1061 = vmul.f32 %v1060, %v1060
    %v1063 = vcombine.high %v1061, %v1061
    %v1065 = vunpack.c.l.s4 1983009808
    %v1066 = vunpack.c.0.s8 %v1065
    %v1067 = vlaneseq
    %v1068 = vshrl.u32 %v1067, 7
    %v1069 = vsub.s32 %v1066, %v1068
    %v1070 = vrot.slane %v1061, %v1069
    %v1072 = vunpack.c.l.s4 1983009808
    %v1073 = vunpack.c.0.s8 %v1072
    %v1074 = vlaneseq
    %v1075 = vshrl.u32 %v1074, 7
    %v1076 = vsub.s32 %v1073, %v1075
    %v1077 = vrot.slane %v1063, %v1076
    %v1078 = vcombine.high %v1070, %v1070
    %v1079 = vcombine.high %v1077, %v1077
    %vm1084 = vcmask 1041408
    %v1085 = vsel %vm1084, %v1070, 0.0
    %v1086 = vsel %vm1084, %v1078, 0.0
    %v1087 = vadd.f32 %v1085, %v1086
    %v1088 = vsel %vm1084, %v1077, 0.0
    %v1089 = vadd.f32 %v1087, %v1088
    %v1090 = vsel %vm1084, %v1079, 0.0
    %v1091 = vadd.f32 %v1089, %v1090
    %1092 = vadd.xlane.f32.xlu0 %v1091
    %v1093 = vpop.xlane.xlu0 %1092
    %v1094 = vadd.f32 %v1048, %v1093
    %v1095 = vmul.f32 %v1056, %v1056
    %v1097 = vcombine.high %v1095, %v1095
    %v1099 = vunpack.c.l.s4 1983009808
    %v1100 = vunpack.c.0.s8 %v1099
    %v1101 = vlaneseq
    %v1102 = vshrl.u32 %v1101, 7
    %v1103 = vsub.s32 %v1100, %v1102
    %v1104 = vrot.slane %v1095, %v1103
    %v1106 = vunpack.c.l.s4 1983009808
    %v1107 = vunpack.c.0.s8 %v1106
    %v1108 = vlaneseq
    %v1109 = vshrl.u32 %v1108, 7
    %v1110 = vsub.s32 %v1107, %v1109
    %v1111 = vrot.slane %v1097, %v1110
    %v1112 = vcombine.high %v1104, %v1104
    %v1113 = vcombine.high %v1111, %v1111
    %v1118 = vsel %vm1084, %v1104, 0.0
    %v1119 = vsel %vm1084, %v1112, 0.0
    %v1120 = vadd.f32 %v1118, %v1119
    %v1121 = vsel %vm1084, %v1111, 0.0
    %v1122 = vadd.f32 %v1120, %v1121
    %v1123 = vsel %vm1084, %v1113, 0.0
    %v1124 = vadd.f32 %v1122, %v1123
    %1125 = vadd.xlane.f32.xlu0 %v1124
    %v1126 = vpop.xlane.xlu0 %1125
    %v1127 = vadd.f32 %v1049, %v1126
    %v1128 = vmul.f32 %v1059, %v1059
    %v1130 = vcombine.high %v1128, %v1128
    %v1132 = vunpack.c.l.s4 1983009808
    %v1133 = vunpack.c.0.s8 %v1132
    %v1134 = vlaneseq
    %v1135 = vshrl.u32 %v1134, 7
    %v1136 = vsub.s32 %v1133, %v1135
    %v1137 = vrot.slane %v1128, %v1136
    %v1139 = vunpack.c.l.s4 1983009808
    %v1140 = vunpack.c.0.s8 %v1139
    %v1141 = vlaneseq
    %v1142 = vshrl.u32 %v1141, 7
    %v1143 = vsub.s32 %v1140, %v1142
    %v1144 = vrot.slane %v1130, %v1143
    %v1145 = vcombine.high %v1137, %v1137
    %v1146 = vcombine.high %v1144, %v1144
    %v1151 = vsel %vm1084, %v1137, 0.0
    %v1152 = vsel %vm1084, %v1145, 0.0
    %v1153 = vadd.f32 %v1151, %v1152
    %v1154 = vsel %vm1084, %v1144, 0.0
    %v1155 = vadd.f32 %v1153, %v1154
    %v1156 = vsel %vm1084, %v1146, 0.0
    %v1157 = vadd.f32 %v1155, %v1156
    %1158 = vadd.xlane.f32.xlu0 %v1157
    %v1159 = vpop.xlane.xlu0 %1158
    %v1160 = vadd.f32 %v1050, %v1159
  $region18: #{_efdm_loss_jit.1} parent=0 // loop_footer
    %s1047 = sadd.s32 1, %s1043
  $region19: #{_efdm_loss_jit.1} parent=0 // loop_footer_branch
    %1042 = sbr.rel target = $region15
  $region20: #{_efdm_loss_jit.1} parent=0 // loop_exit
    _
  %v1161 = vld [vmem:[%s3] sm:$0x3]
  %v1162 = vadd.f32 %v1161, %v1048
  %vm1163 = vcmask 1024
  %1164 = vst.msk [vmem:[%s3] sm:$0x3] %vm1163, %v1162
  %v1165 = vld [vmem:[%s4] sm:$0x3]
  %v1166 = vadd.f32 %v1165, %v1049
  %1167 = vst.msk [vmem:[%s4] sm:$0x3] %vm1163, %v1166
  %v1168 = vld [vmem:[%s5] sm:$0x3]
  %v1169 = vadd.f32 %v1168, %v1050
  %1170 = vst.msk [vmem:[%s5] sm:$0x3] %vm1163, %v1169
  // Predicated region
  $region21: #{_efdm_loss_jit.1} parent=0 // pred_check
    _
  $region22: #{_efdm_loss_jit.1} parent=0 // pred_check_branch
    %1172 = sbr.rel (0) target = $region24
  $region23: #{_efdm_loss_jit.1} parent=0 // pred_region
    _
  $region24: #{_efdm_loss_jit.1} parent=0 // pred_fallthru
    _
  // Predicated region
  $region25: #{_efdm_loss_jit.1} parent=0 // pred_check
    _
  $region26: #{_efdm_loss_jit.1} parent=0 // pred_check_branch
    %1174 = sbr.rel (0) target = $region28
  $region27: #{_efdm_loss_jit.1} parent=0 // pred_region
    _
  $region28: #{_efdm_loss_jit.1} parent=0 // pred_fallthru
    _
  // Predicated region
  $region29: #{_efdm_loss_jit.1} parent=0 // pred_check
    _
  $region30: #{_efdm_loss_jit.1} parent=0 // pred_check_branch
    %1176 = sbr.rel (0) target = $region32
  $region31: #{_efdm_loss_jit.1} parent=0 // pred_region
    _
  $region32: #{_efdm_loss_jit.1} parent=0 // pred_fallthru
    _
  // Predicated region
  $region33: #{_efdm_loss_jit.1} parent=0 // pred_check
    _
  $region34: #{_efdm_loss_jit.1} parent=0 // pred_check_branch
    %1178 = sbr.rel (0) target = $region36
  $region35: #{_efdm_loss_jit.1} parent=0 // pred_region
    _
  $region36: #{_efdm_loss_jit.1} parent=0 // pred_fallthru
    _
  // Predicated region
  $region37: #{_efdm_loss_jit.1} parent=0 // pred_check
    _
  $region38: #{_efdm_loss_jit.1} parent=0 // pred_check_branch
    %1180 = sbr.rel (0) target = $region40
  $region39: #{_efdm_loss_jit.1} parent=0 // pred_region
    _
  $region40: #{_efdm_loss_jit.1} parent=0 // pred_fallthru
    _
  // Predicated region
  $region41: #{_efdm_loss_jit.1} parent=0 // pred_check
    _
  $region42: #{_efdm_loss_jit.1} parent=0 // pred_check_branch
    %1182 = sbr.rel (0) target = $region44
  $region43: #{_efdm_loss_jit.1} parent=0 // pred_region
    _
  $region44: #{_efdm_loss_jit.1} parent=0 // pred_fallthru
    _
  // Predicated region
  $region45: #{_efdm_loss_jit.1} parent=0 // pred_check
    _
  $region46: #{_efdm_loss_jit.1} parent=0 // pred_check_branch
    %1184 = sbr.rel (0) target = $region48
  $region47: #{_efdm_loss_jit.1} parent=0 // pred_region
    _
  $region48: #{_efdm_loss_jit.1} parent=0 // pred_fallthru
    _
  // Predicated region
  $region49: #{_efdm_loss_jit.1} parent=0 // pred_check
    _
  $region50: #{_efdm_loss_jit.1} parent=0 // pred_check_branch
    %1186 = sbr.rel (0) target = $region52
  $region51: #{_efdm_loss_jit.1} parent=0 // pred_region
    _
  $region52: #{_efdm_loss_jit.1} parent=0 // pred_fallthru
    _

</llo_original>
